<compile_context>
chip_gen: v7x
topology: tpu7x:2x2x1
jax: 0.10.0
libtpu: 0.0.40
codegen_flags: <defaults>
</compile_context>

<pallas_src>
import functools

import jax
import jax.numpy as jnp
import numpy as np
from jax import lax
from jax.experimental import pallas as pl
from jax.experimental.pallas import tpu as pltpu

_MIB = 1024 * 1024


# ----------------------------- Pallas kernel -------------------------------


def _uhg_sage_kernel(adj_ref, xk_ref, xt_ref, dinv_ref, w1_ref, w2_ref, b_ref,
                     o_ref, acc_ref, *, d_out):
    k = pl.program_id(1)

    @pl.when(k == 0)
    def _():
        acc_ref[...] = jnp.zeros_like(acc_ref)

    # Neighbour sum: int8 adjacency tile upcast to f32 (exact -- entries are
    # small edge multiplicities), contracted against the f32 x K-block.
    acc_ref[...] += jnp.dot(adj_ref[...].astype(jnp.float32), xk_ref[...],
                            preferred_element_type=jnp.float32)

    @pl.when(k == pl.num_programs(1) - 1)
    def _():
        agg = acc_ref[...] * dinv_ref[...]          # mean over in-neighbours

        # linear(cat([x, agg])) + bias with pre-split, pre-transposed,
        # zero-padded (lane-dense) weights; then ReLU.
        h = (jnp.dot(xt_ref[...], w1_ref[...], preferred_element_type=jnp.float32)
             + jnp.dot(agg, w2_ref[...], preferred_element_type=jnp.float32)
             + b_ref[...])
        h = jnp.maximum(h, 0.0)                     # padded columns stay exactly 0

        # Single cross-lane reduction drives the whole normalisation:
        #   uhg_norm = s - hom^2 = s - 1      (the homogeneous column is 1)
        #   zero rows <=> s == 0              (h >= 0 after the ReLU)
        #   l2^2 = s * inv_uhg^2 (non-zero)   /  d_out (zero rows -> all-ones)
        s = jnp.sum(h * h, axis=-1, keepdims=True)
        inv_uhg = lax.rsqrt(jnp.maximum(s - 1.0, 1e-8))
        feat = h * inv_uhg

        cols = lax.broadcasted_iota(jnp.int32, feat.shape, 1)
        real = (cols < d_out).astype(feat.dtype)    # 1 on real columns, 0 on padding
        zero = s == 0.0
        feat = jnp.where(zero, real, feat)
        l2sq = jnp.where(zero, jnp.float32(d_out), s * inv_uhg * inv_uhg)
        feat = feat * (1.0 / jnp.maximum(jnp.sqrt(l2sq), 1e-8))

        # Lane-dense store: homogeneous 1.0 at column d_out (sign(1) == 1);
        # padding columns hold zeros and are sliced off by the wrapper.
        o_ref[...] = jnp.where(cols == d_out, jnp.float32(1.0), feat)


# ------------------------------ host wrapper --------------------------------


def _round_up(v, m):
    return ((v + m - 1) // m) * m


def _vmem_capacity_bytes():
    try:
        cap = getattr(pltpu.get_tpu_info(), "vmem_capacity_bytes", None)
        if cap:
            return int(cap)
    except Exception:
        pass
    return 64 * _MIB          # conservative default (v7x per-core VMEM)


_VMEM_CAP = _vmem_capacity_bytes()


def _stream_bytes(tm, tk, cpad, dpad):
    """Per-step VMEM footprint of the streamed / scratch buffers."""
    return (2 * tm * tk                    # int8 adj tile, double-buffered
            + 4 * tm * tk                  # in-kernel f32 upcast of one tile
            + 2 * tk * cpad * 4            # x K-block, double-buffered
            + 2 * tm * cpad * 4            # x row tile (epilogue)
            + 2 * tm * 128 * 4             # 1/deg column (lane-padded)
            + 2 * tm * dpad * 4            # output tile
            + tm * cpad * 4)               # f32 accumulator scratch


def _pick_tiles(n, cpad, dpad, vmem_cap):
    resident = 2 * (2 * cpad * dpad + 8 * dpad) * 4          # W1^T, W2^T, bias
    budget = max(8 * _MIB, vmem_cap // 2 - resident)

    tm = min(512, _round_up(n, 32))                          # int8 sublane packing
    # Give the "parallel" row axis >= 2 tiles when the graph allows it so
    # v7x's two TensorCores both get work (harmless on single-core v5e/v6e).
    if _round_up(n, tm) // tm < 2 and n > 32:
        tm = max(32, _round_up((n + 1) // 2, 32))
    tk = min(2048, _round_up(n, 128))                        # sweepable {512,1024,2048}

    while tk > 128 and _stream_bytes(tm, tk, cpad, dpad) > budget:
        tk = max(128, _round_up(tk // 2, 128))
    while tm > 32 and _stream_bytes(tm, tk, cpad, dpad) > budget:
        tm = max(32, _round_up(tm // 2, 32))
    return tm, tk


@functools.partial(jax.jit, static_argnames=("num_nodes",))
def uhg_sage_conv(x, edge_index, weight, bias, *, num_nodes):
    """Forward pass of UHGSAGEConv(append_uhg=True)."""
    n, c = x.shape
    assert n == num_nodes
    d = weight.shape[0]
    assert weight.shape[1] == 2 * c

    cpad = _round_up(c, 128)          # lane-dense feature dim
    dpad = _round_up(d + 1, 128)      # lane-dense output dim (incl. hom column)
    tm, tk = _pick_tiles(n, cpad, dpad, _VMEM_CAP)
    npad_r = _round_up(n, tm)
    npad_c = _round_up(n, tk)
    npad_x = max(npad_r, npad_c)      # x serves both the K stream and row tiles
    num_i = npad_r // tm
    num_k = npad_c // tk

    row, col = edge_index[0], edge_index[1]

    # Densify straight into the final padded int8 layout (single O(N^2) pass).
    adj_p = jnp.zeros((npad_r, npad_c), jnp.int8).at[row, col].add(
        jnp.ones_like(row, dtype=jnp.int8))

    # Hoisted O(E) degree computation -> 1/deg column (padded rows get 1.0).
    count = jnp.zeros((n,), jnp.float32).at[row].add(1.0)
    dinv = 1.0 / jnp.maximum(count, 1.0)
    dinv_p = jnp.ones((npad_r, 1), jnp.float32).at[:n, 0].set(dinv)

    # Lane-dense zero padding (zeros are semantically inert everywhere).
    x_p = jnp.zeros((npad_x, cpad), jnp.float32).at[:n, :c].set(x)
    w1_p = jnp.zeros((cpad, dpad), jnp.float32).at[:c, :d].set(weight[:, :c].T)
    w2_p = jnp.zeros((cpad, dpad), jnp.float32).at[:c, :d].set(weight[:, c:].T)
    b_p = jnp.zeros((1, dpad), jnp.float32).at[0, :d].set(bias)

    est = _stream_bytes(tm, tk, cpad, dpad) + 2 * (2 * cpad * dpad + 8 * dpad) * 4
    vmem_limit = int(min(_VMEM_CAP - 8 * _MIB, max(32 * _MIB, 2 * est)))

    out = pl.pallas_call(
        functools.partial(_uhg_sage_kernel, d_out=d),
        out_shape=jax.ShapeDtypeStruct((npad_r, dpad), jnp.float32),
        grid=(num_i, num_k),
        in_specs=[
            pl.BlockSpec((tm, tk), lambda i, k: (i, k)),       # adj tile (int8 stream)
            pl.BlockSpec((tk, cpad), lambda i, k: (k, 0)),     # x K-block
            pl.BlockSpec((tm, cpad), lambda i, k: (i, 0)),     # x row tile (1 DMA / row tile)
            pl.BlockSpec((tm, 1), lambda i, k: (i, 0)),        # 1/deg column
            pl.BlockSpec((cpad, dpad), lambda i, k: (0, 0)),   # W1^T (resident)
            pl.BlockSpec((cpad, dpad), lambda i, k: (0, 0)),   # W2^T (resident)
            pl.BlockSpec((1, dpad), lambda i, k: (0, 0)),      # bias (resident)
        ],
        out_specs=pl.BlockSpec((tm, dpad), lambda i, k: (i, 0)),
        scratch_shapes=[pltpu.VMEM((tm, cpad), jnp.float32)],  # agg accumulator
        compiler_params=pltpu.CompilerParams(
            dimension_semantics=("parallel", "arbitrary"),
            vmem_limit_bytes=vmem_limit),
    )(adj_p, x_p, x_p, dinv_p, w1_p, w2_p, b_p)

    return out[:n, :d + 1]


# --------------------------- pure-JAX reference -----------------------------


def _reference(x, edge_index, weight, bias):
    row, col = edge_index[0], edge_index[1]
    n = x.shape[0]
    agg = jnp.zeros_like(x).at[row].add(x[col])
    count = jnp.zeros((n,), jnp.float32).at[row].add(1.0)
    agg = agg / jnp.clip(count, 1.0)[:, None]
    h = jnp.concatenate([x, agg], axis=1) @ weight.T + bias
    h = jax.nn.relu(h)
    hom = jnp.ones((n, 1), jnp.float32)
    o = jnp.concatenate([h, hom], axis=1)
    feat, hom = o[:, :-1], o[:, -1:]
    norm = jnp.sqrt(jnp.clip(jnp.sum(feat**2, -1, keepdims=True) - hom**2, 1e-8))
    feat = feat / norm
    hom = jnp.sign(hom) * jnp.ones_like(hom)
    zero_mask = jnp.all(feat == 0, axis=-1, keepdims=True)
    feat = jnp.where(zero_mask, jnp.ones_like(feat), feat)
    l2 = jnp.linalg.norm(feat, axis=-1, keepdims=True)
    feat = feat / jnp.clip(l2, 1e-8)
    sgn = jnp.sign(hom)
    sgn = jnp.where(sgn == 0, jnp.ones_like(sgn), sgn)
    return jnp.concatenate([feat, hom], axis=-1) * sgn


# --------------------------------- main -------------------------------------


if __name__ == "__main__":
    N, C_IN, C_OUT, E = 16, 8, 32, 48

    key = jax.random.PRNGKey(0)
    kx, ke1, ke2, kw = jax.random.split(key, 4)

    # Node features and a random edge list.
    x = jax.random.normal(kx, (N, C_IN), dtype=jnp.float32)
    row = jax.random.randint(ke1, (E,), 0, N)
    col = jax.random.randint(ke2, (E,), 0, N)
    edge_index = jnp.stack([row, col], axis=0)           # (2, E)

    # Deterministic parameter init mimicking nn.init.orthogonal_ + row-norm.
    g = jax.random.normal(kw, (max(C_OUT, 2 * C_IN), min(C_OUT, 2 * C_IN)),
                          dtype=jnp.float32)
    q, _ = jnp.linalg.qr(g)                              # orthonormal columns
    W = q if q.shape == (C_OUT, 2 * C_IN) else q.T       # (C_OUT, 2*C_IN)
    W = W / jnp.clip(jnp.linalg.norm(W, axis=1, keepdims=True), 1e-8)
    bias = jnp.zeros((C_OUT,), jnp.float32)

    out = uhg_sage_conv(x, edge_index, W, bias, num_nodes=N)
    out = jax.block_until_ready(out)

    ref = _reference(x, edge_index, W, bias)
    np.testing.assert_allclose(np.asarray(out), np.asarray(ref),
                               rtol=1e-4, atol=1e-4)

    print("KERNEL_OK")
</pallas_src>

<mosaic_0001>
module attributes {stable_mosaic.version = 11 : i64} {
  func.func private @main(%arg0: i32) attributes {dimension_semantics = [#tpu.dimension_semantics<core_parallel>], iteration_bounds = array<i64: 2>, tpu.core_type = #tpu.core_type<sc_scalar_subcore>, window_params = []} {
    return
  }
}

module attributes {stable_mosaic.version = 11 : i64} {
  func.func private @main(%arg0: i32) attributes {dimension_semantics = [#tpu.dimension_semantics<core_parallel>], iteration_bounds = array<i64: 2>, tpu.core_type = #tpu.core_type<sc_scalar_subcore>, window_params = []} {
    return
  }
}

module attributes {stable_mosaic.version = 11 : i64} {
  func.func @_uhg_sage_kernel(%arg0: i32, %arg1: i32, %arg2: memref<32x128xi8, #tpu.memory_space<vmem>>, %arg3: memref<128x128xf32, #tpu.memory_space<vmem>>, %arg4: memref<32x128xf32, #tpu.memory_space<vmem>>, %arg5: memref<32x1xf32, #tpu.memory_space<vmem>>, %arg6: memref<128x128xf32, #tpu.memory_space<vmem>>, %arg7: memref<128x128xf32, #tpu.memory_space<vmem>>, %arg8: memref<1x128xf32, #tpu.memory_space<vmem>>, %arg9: memref<32x128xf32, #tpu.memory_space<vmem>>, %arg10: memref<32x128xf32, #tpu.memory_space<vmem>>) attributes {dimension_semantics = [#tpu.dimension_semantics<parallel>, #tpu.dimension_semantics<arbitrary>], iteration_bounds = array<i64: 1, 1>, scalar_prefetch = 0 : i64, scratch_operands = 1 : i64, tpu.core_type = #tpu.core_type<tc>, window_params = [{transform_indices = @transform_0, window_bounds = array<i64: 32, 128>}, {transform_indices = @transform_1, window_bounds = array<i64: 128, 128>}, {transform_indices = @transform_2, window_bounds = array<i64: 32, 128>}, {transform_indices = @transform_3, window_bounds = array<i64: 32, 1>}, {pipeline_mode = #tpu.pipeline_mode<synchronous>, transform_indices = @transform_4, window_bounds = array<i64: 128, 128>}, {pipeline_mode = #tpu.pipeline_mode<synchronous>, transform_indices = @transform_5, window_bounds = array<i64: 128, 128>}, {pipeline_mode = #tpu.pipeline_mode<synchronous>, transform_indices = @transform_6, window_bounds = array<i64: 1, 128>}, {transform_indices = @transform_7, window_bounds = array<i64: 32, 128>}]} {
    %c0_i32 = arith.constant 0 : i32
    %0 = arith.cmpi eq, %arg1, %c0_i32 : i32
    %1 = arith.extui %0 : i1 to i32
    %c0_i32_0 = arith.constant 0 : i32
    %2 = arith.cmpi ne, %1, %c0_i32_0 : i32
    scf.if %2 {
      %cst_10 = arith.constant 0.000000e+00 : f32
      %13 = vector.broadcast %cst_10 : f32 to vector<32x128xf32>
      %c0_11 = arith.constant 0 : index
      %c0_12 = arith.constant 0 : index
      %14 = vector.load %arg10[%c0_11, %c0_12] : memref<32x128xf32, #tpu.memory_space<vmem>>, vector<32x128xf32>
      tpu.vector_store %arg10[%c0_11, %c0_12], %13 {strides = array<i32>} : memref<32x128xf32, #tpu.memory_space<vmem>>, vector<32x128xf32>,
    } else {
    }
    %c0 = arith.constant 0 : index
    %c0_1 = arith.constant 0 : index
    %3 = vector.load %arg10[%c0, %c0_1] : memref<32x128xf32, #tpu.memory_space<vmem>>, vector<32x128xf32>
    %c0_2 = arith.constant 0 : index
    %c0_3 = arith.constant 0 : index
    %4 = vector.load %arg2[%c0_2, %c0_3] : memref<32x128xi8, #tpu.memory_space<vmem>>, vector<32x128xi8>
    %5 = arith.sitofp %4 : vector<32x128xi8> to vector<32x128xf32>
    %c0_4 = arith.constant 0 : index
    %c0_5 = arith.constant 0 : index
    %6 = vector.load %arg3[%c0_4, %c0_5] : memref<128x128xf32, #tpu.memory_space<vmem>>, vector<128x128xf32>
    %cst = arith.constant dense<0.000000e+00> : vector<32x128xf32>
    %7 = tpu.matmul %5, %6, %cst {dimension_numbers = #tpu.dot_dimension_numbers<[1], [0], [0], [1], [0, 0, 1, 1], [], []>} : vector<32x128xf32>, vector<128x128xf32>, vector<32x128xf32> -> vector<32x128xf32>
    %8 = arith.addf %3, %7 : vector<32x128xf32>
    %c0_6 = arith.constant 0 : index
    %c0_7 = arith.constant 0 : index
    %9 = vector.load %arg10[%c0_6, %c0_7] : memref<32x128xf32, #tpu.memory_space<vmem>>, vector<32x128xf32>
    tpu.vector_store %arg10[%c0_6, %c0_7], %8 {strides = array<i32>} : memref<32x128xf32, #tpu.memory_space<vmem>>, vector<32x128xf32>,
    %c0_i32_8 = arith.constant 0 : i32
    %10 = arith.cmpi eq, %arg1, %c0_i32_8 : i32
    %11 = arith.extui %10 : i1 to i32
    %c0_i32_9 = arith.constant 0 : i32
    %12 = arith.cmpi ne, %11, %c0_i32_9 : i32
    scf.if %12 {
      %c0_10 = arith.constant 0 : index
      %c0_11 = arith.constant 0 : index
      %13 = vector.load %arg10[%c0_10, %c0_11] : memref<32x128xf32, #tpu.memory_space<vmem>>, vector<32x128xf32>
      %c0_12 = arith.constant 0 : index
      %c0_13 = arith.constant 0 : index
      %14 = vector.load %arg5[%c0_12, %c0_13] : memref<32x1xf32, #tpu.memory_space<vmem>>, vector<32x1xf32>
      %15 = vector.broadcast %14 : vector<32x1xf32> to vector<32x128xf32>
      %16 = arith.mulf %13, %15 : vector<32x128xf32>
      %c0_14 = arith.constant 0 : index
      %c0_15 = arith.constant 0 : index
      %17 = vector.load %arg4[%c0_14, %c0_15] : memref<32x128xf32, #tpu.memory_space<vmem>>, vector<32x128xf32>
      %c0_16 = arith.constant 0 : index
      %c0_17 = arith.constant 0 : index
      %18 = vector.load %arg6[%c0_16, %c0_17] : memref<128x128xf32, #tpu.memory_space<vmem>>, vector<128x128xf32>
      %cst_18 = arith.constant dense<0.000000e+00> : vector<32x128xf32>
      %19 = tpu.matmul %17, %18, %cst_18 {dimension_numbers = #tpu.dot_dimension_numbers<[1], [0], [0], [1], [0, 0, 1, 1], [], []>} : vector<32x128xf32>, vector<128x128xf32>, vector<32x128xf32> -> vector<32x128xf32>
      %c0_19 = arith.constant 0 : index
      %c0_20 = arith.constant 0 : index
      %20 = vector.load %arg7[%c0_19, %c0_20] : memref<128x128xf32, #tpu.memory_space<vmem>>, vector<128x128xf32>
      %cst_21 = arith.constant dense<0.000000e+00> : vector<32x128xf32>
      %21 = tpu.matmul %16, %20, %cst_21 {dimension_numbers = #tpu.dot_dimension_numbers<[1], [0], [0], [1], [0, 0, 1, 1], [], []>} : vector<32x128xf32>, vector<128x128xf32>, vector<32x128xf32> -> vector<32x128xf32>
      %22 = arith.addf %19, %21 : vector<32x128xf32>
      %c0_22 = arith.constant 0 : index
      %c0_23 = arith.constant 0 : index
      %23 = vector.load %arg8[%c0_22, %c0_23] : memref<1x128xf32, #tpu.memory_space<vmem>>, vector<1x128xf32>
      %24 = vector.broadcast %23 : vector<1x128xf32> to vector<32x128xf32>
      %25 = arith.addf %22, %24 : vector<32x128xf32>
      %cst_24 = arith.constant 0.000000e+00 : f32
      %26 = vector.broadcast %cst_24 : f32 to vector<32x128xf32>
      %27 = arith.maximumf %25, %26 : vector<32x128xf32>
      %28 = arith.mulf %27, %27 : vector<32x128xf32>
      %cst_25 = arith.constant dense<0.000000e+00> : vector<32xf32>
      %29 = vector.multi_reduction <add>, %28, %cst_25 [1] : vector<32x128xf32> to vector<32xf32>
      %30 = vector.shape_cast %29 : vector<32xf32> to vector<32x1xf32>
      %cst_26 = arith.constant 1.000000e+00 : f32
      %31 = vector.broadcast %cst_26 : f32 to vector<32x1xf32>
      %32 = arith.subf %30, %31 : vector<32x1xf32>
      %cst_27 = arith.constant 9.99999993E-9 : f32
      %33 = vector.broadcast %cst_27 : f32 to vector<32x1xf32>
      %34 = arith.maximumf %32, %33 : vector<32x1xf32>
      %35 = math.rsqrt %34 : vector<32x1xf32>
      %36 = vector.broadcast %35 : vector<32x1xf32> to vector<32x128xf32>
      %37 = arith.mulf %27, %36 : vector<32x128xf32>
      %38 = tpu.iota {dimensions = array<i32: 1>} : vector<32x128xi32>
      %c32_i32 = arith.constant 32 : i32
      %39 = vector.broadcast %c32_i32 : i32 to vector<32x128xi32>
      %40 = arith.cmpi slt, %38, %39 : vector<32x128xi32>
      %41 = arith.extui %40 : vector<32x128xi1> to vector<32x128xi32>
      %42 = arith.sitofp %41 : vector<32x128xi32> to vector<32x128xf32>
      %cst_28 = arith.constant 0.000000e+00 : f32
      %43 = vector.broadcast %cst_28 : f32 to vector<32x1xf32>
      %44 = arith.cmpf oeq, %30, %43 : vector<32x1xf32>
      %45 = vector.shape_cast %44 : vector<32x1xi1> to vector<32x1xi1>
      %46 = vector.broadcast %45 : vector<32x1xi1> to vector<32x128xi1>
      %47 = arith.select %46, %42, %37 : vector<32x128xi1>, vector<32x128xf32>
      %48 = arith.mulf %30, %35 : vector<32x1xf32>
      %49 = arith.mulf %48, %35 : vector<32x1xf32>
      %cst_29 = arith.constant 3.200000e+01 : f32
      %50 = vector.broadcast %cst_29 : f32 to vector<32x1xf32>
      %51 = arith.select %44, %50, %49 : vector<32x1xi1>, vector<32x1xf32>
      %52 = math.sqrt %51 : vector<32x1xf32>
      %cst_30 = arith.constant 9.99999993E-9 : f32
      %53 = vector.broadcast %cst_30 : f32 to vector<32x1xf32>
      %54 = arith.maximumf %52, %53 : vector<32x1xf32>
      %cst_31 = arith.constant 1.000000e+00 : f32
      %55 = vector.broadcast %cst_31 : f32 to vector<32x1xf32>
      %56 = arith.divf %55, %54 : vector<32x1xf32>
      %57 = vector.broadcast %56 : vector<32x1xf32> to vector<32x128xf32>
      %58 = arith.mulf %47, %57 : vector<32x128xf32>
      %c32_i32_32 = arith.constant 32 : i32
      %59 = vector.broadcast %c32_i32_32 : i32 to vector<32x128xi32>
      %60 = arith.cmpi eq, %38, %59 : vector<32x128xi32>
      %cst_33 = arith.constant 1.000000e+00 : f32
      %61 = vector.broadcast %cst_33 : f32 to vector<32x128xf32>
      %62 = arith.select %60, %61, %58 : vector<32x128xi1>, vector<32x128xf32>
      %c0_34 = arith.constant 0 : index
      %c0_35 = arith.constant 0 : index
      %63 = vector.load %arg9[%c0_34, %c0_35] : memref<32x128xf32, #tpu.memory_space<vmem>>, vector<32x128xf32>
      tpu.vector_store %arg9[%c0_34, %c0_35], %62 {strides = array<i32>} : memref<32x128xf32, #tpu.memory_space<vmem>>, vector<32x128xf32>,
    } else {
    }
    return
  }
  func.func @transform_0(%arg0: i32, %arg1: i32) -> (i32, i32) {
    %c0_i32 = arith.constant 0 : i32
    return %arg0, %arg1 : i32, i32
  }
  func.func @transform_1(%arg0: i32, %arg1: i32) -> (i32, i32) {
    %c0_i32 = arith.constant 0 : i32
    %c0_i32_0 = arith.constant 0 : i32
    return %arg1, %c0_i32 : i32, i32
  }
  func.func @transform_2(%arg0: i32, %arg1: i32) -> (i32, i32) {
    %c0_i32 = arith.constant 0 : i32
    %c0_i32_0 = arith.constant 0 : i32
    return %arg0, %c0_i32 : i32, i32
  }
  func.func @transform_3(%arg0: i32, %arg1: i32) -> (i32, i32) {
    %c0_i32 = arith.constant 0 : i32
    %c0_i32_0 = arith.constant 0 : i32
    return %arg0, %c0_i32 : i32, i32
  }
  func.func @transform_4(%arg0: i32, %arg1: i32) -> (i32, i32) {
    %c0_i32 = arith.constant 0 : i32
    %c0_i32_0 = arith.constant 0 : i32
    %c0_i32_1 = arith.constant 0 : i32
    return %c0_i32, %c0_i32_0 : i32, i32
  }
  func.func @transform_5(%arg0: i32, %arg1: i32) -> (i32, i32) {
    %c0_i32 = arith.constant 0 : i32
    %c0_i32_0 = arith.constant 0 : i32
    %c0_i32_1 = arith.constant 0 : i32
    return %c0_i32, %c0_i32_0 : i32, i32
  }
  func.func @transform_6(%arg0: i32, %arg1: i32) -> (i32, i32) {
    %c0_i32 = arith.constant 0 : i32
    %c0_i32_0 = arith.constant 0 : i32
    %c0_i32_1 = arith.constant 0 : i32
    return %c0_i32, %c0_i32_0 : i32, i32
  }
  func.func @transform_7(%arg0: i32, %arg1: i32) -> (i32, i32) {
    %c0_i32 = arith.constant 0 : i32
    %c0_i32_0 = arith.constant 0 : i32
    return %arg0, %c0_i32 : i32, i32
  }
}

</mosaic_0001>

<llo_original>
// kernel: uhg_sage_conv.1
$region0: #{uhg_sage_conv.1}
  #allocation0 [shape = 'u32[]', space=smem, size = 0x4, offset = 0x4, fixed_abs, tag = 'smem constant byte address 0x4 - core index']
  #allocation1 [shape = 'u32[144,128]{1,0:T(1,128)}', space=vmem, size = 0x12000, scoped, tag = 'internal scratch']
  #allocation2 [shape = 'f32[32,128]{1,0:T(8,128)}', space=vmem, size = 0x4000, scoped, tag = 'scratch operand']
  %s0 = inlined_call_operand.vmem [shape: s8[32,128], index: 0, kind: input, shape index: {}]
  %s1 = inlined_call_operand.vmem [shape: f32[128,128], index: 1, kind: input, shape index: {}, may-alias: {1,2}]
  %s2 = inlined_call_operand.vmem [shape: f32[128,128], index: 2, kind: input, shape index: {}, may-alias: {1,2}]
  %s3 = inlined_call_operand.vmem [shape: f32[32,1], index: 3, kind: input, shape index: {}]
  %s4 = inlined_call_operand.vmem [shape: f32[128,128], index: 4, kind: input, shape index: {}]
  %s5 = inlined_call_operand.vmem [shape: f32[128,128], index: 5, kind: input, shape index: {}]
  %s6 = inlined_call_operand.vmem [shape: f32[1,128], index: 6, kind: input, shape index: {}]
  %s7 = inlined_call_operand.vmem [shape: f32[32,128], index: 7, kind: output, shape index: {}]
  %s8 = sld [smem:[#allocation0]]
  $region46: #{uhg_sage_conv.1} parent=0
    _
  %s10 = ssub.s32 1, %s8
  %s11 = scalar_select 0, %s10, %s8
  // Predicated region
  $region2: #{uhg_sage_conv.1} parent=0 // pred_check
    _
  $region3: #{uhg_sage_conv.1} parent=0 // pred_check_branch
    %13 = sbr.rel (0) target = $region5
  $region4: #{uhg_sage_conv.1} parent=0 // pred_region
    _
  $region5: #{uhg_sage_conv.1} parent=0 // pred_fallthru
    _
  // Predicated region
  $region6: #{uhg_sage_conv.1} parent=0 // pred_check
    _
  $region7: #{uhg_sage_conv.1} parent=0 // pred_check_branch
    %15 = sbr.rel (0) target = $region9
  $region8: #{uhg_sage_conv.1} parent=0 // pred_region
    _
  $region9: #{uhg_sage_conv.1} parent=0 // pred_fallthru
    _
  // Predicated region
  $region10: #{uhg_sage_conv.1} parent=0 // pred_check
    _
  $region11: #{uhg_sage_conv.1} parent=0 // pred_check_branch
    %17 = sbr.rel (0) target = $region13
  $region12: #{uhg_sage_conv.1} parent=0 // pred_region
    _
  $region13: #{uhg_sage_conv.1} parent=0 // pred_fallthru
    _
  // Predicated region
  $region14: #{uhg_sage_conv.1} parent=0 // pred_check
    _
  $region15: #{uhg_sage_conv.1} parent=0 // pred_check_branch
    %19 = sbr.rel (0) target = $region17
  $region16: #{uhg_sage_conv.1} parent=0 // pred_region
    _
  $region17: #{uhg_sage_conv.1} parent=0 // pred_fallthru
    _
  // Predicated region
  $region18: #{uhg_sage_conv.1} parent=0 // pred_check
    _
  $region19: #{uhg_sage_conv.1} parent=0 // pred_check_branch
    %21 = sbr.rel (0) target = $region21
  $region20: #{uhg_sage_conv.1} parent=0 // pred_region
    _
  $region21: #{uhg_sage_conv.1} parent=0 // pred_fallthru
    _
  // Predicated region
  $region22: #{uhg_sage_conv.1} parent=0 // pred_check
    _
  $region23: #{uhg_sage_conv.1} parent=0 // pred_check_branch
    %23 = sbr.rel (0) target = $region25
  $region24: #{uhg_sage_conv.1} parent=0 // pred_region
    _
  $region25: #{uhg_sage_conv.1} parent=0 // pred_fallthru
    _
  // Predicated region
  $region26: #{uhg_sage_conv.1} parent=0 // pred_check
    _
  $region27: #{uhg_sage_conv.1} parent=0 // pred_check_branch
    %25 = sbr.rel (0) target = $region29
  $region28: #{uhg_sage_conv.1} parent=0 // pred_region
    _
  $region29: #{uhg_sage_conv.1} parent=0 // pred_fallthru
    _
  %p26 = scmp.eq.s32.totalorder 0, 0
  // Predicated region
  $region30: #{uhg_sage_conv.1} parent=0 // pred_check
    %p27 = pneg %p26
  $region31: #{uhg_sage_conv.1} parent=0 // pred_check_branch
    %29 = sbr.rel (%p27) target = $region33
  $region32: #{uhg_sage_conv.1} parent=0 // pred_region
    %30 = vst [vmem:[#allocation2] sm:$0xff] 0.0
    %31 = vst [vmem:[#allocation2 + $0x8] sm:$0xff] 0.0
    %32 = vst [vmem:[#allocation2 + $0x10] sm:$0xff] 0.0
    %33 = vst [vmem:[#allocation2 + $0x18] sm:$0xff] 0.0
  $region33: #{uhg_sage_conv.1} parent=0 // pred_fallthru
    _
  %v34 = vld [vmem:[#allocation2] sm:$0xff]
  %v35 = vld [vmem:[#allocation2 + $0x8] sm:$0xff]
  %v36 = vld [vmem:[#allocation2 + $0x10] sm:$0xff]
  %v37 = vld [vmem:[#allocation2 + $0x18] sm:$0xff]
  %v38 = vld [vmem:[%s0] sm:$0x3]
  %v39 = vld [vmem:[%s0 + $0x2] sm:$0x3]
  %v40 = vld [vmem:[%s0 + $0x4] sm:$0x3]
  %v41 = vld [vmem:[%s0 + $0x6] sm:$0x3]
  %v42 = vunpack.c.0.s8 %v38
  %v43 = vunpack.c.0.s8 %v39
  %v44 = vunpack.c.0.s8 %v40
  %v45 = vunpack.c.0.s8 %v41
  %v46 = vcvt.s32.f32 %v42
  %v47 = vcvt.s32.f32 %v43
  %v48 = vcvt.s32.f32 %v44
  %v49 = vcvt.s32.f32 %v45
  %v50 = vld [vmem:[%s1] sm:$0xff]
  %v51 = vld [vmem:[%s1 + $0x8] sm:$0xff]
  %v52 = vld [vmem:[%s1 + $0x10] sm:$0xff]
  %v53 = vld [vmem:[%s1 + $0x18] sm:$0xff]
  %v54 = vld [vmem:[%s1 + $0x20] sm:$0xff]
  %v55 = vld [vmem:[%s1 + $0x28] sm:$0xff]
  %v56 = vld [vmem:[%s1 + $0x30] sm:$0xff]
  %v57 = vld [vmem:[%s1 + $0x38] sm:$0xff]
  %v58 = vld [vmem:[%s1 + $0x40] sm:$0xff]
  %v59 = vld [vmem:[%s1 + $0x48] sm:$0xff]
  %v60 = vld [vmem:[%s1 + $0x50] sm:$0xff]
  %v61 = vld [vmem:[%s1 + $0x58] sm:$0xff]
  %v62 = vld [vmem:[%s1 + $0x60] sm:$0xff]
  %v63 = vld [vmem:[%s1 + $0x68] sm:$0xff]
  %v64 = vld [vmem:[%s1 + $0x70] sm:$0xff]
  %v65 = vld [vmem:[%s1 + $0x78] sm:$0xff]
  %66 = vmatprep.subr.mxu0 0.0
  %67 = vmatpush1.msra.mxu0 %v50
  %68 = vmatprep.subr.mxu0 0.0
  %69 = vmatpush1.msra.mxu0 %v51
  %70 = vmatprep.subr.mxu0 0.0
  %71 = vmatpush1.msra.mxu0 %v52
  %72 = vmatprep.subr.mxu0 0.0
  %73 = vmatpush1.msra.mxu0 %v53
  %74 = vmatprep.subr.mxu0 0.0
  %75 = vmatpush1.msra.mxu0 %v54
  %76 = vmatprep.subr.mxu0 0.0
  %77 = vmatpush1.msra.mxu0 %v55
  %78 = vmatprep.subr.mxu0 0.0
  %79 = vmatpush1.msra.mxu0 %v56
  %80 = vmatprep.subr.mxu0 0.0
  %81 = vmatpush1.msra.mxu0 %v57
  %82 = vmatprep.subr.mxu0 0.0
  %83 = vmatpush1.msra.mxu0 %v58
  %84 = vmatprep.subr.mxu0 0.0
  %85 = vmatpush1.msra.mxu0 %v59
  %86 = vmatprep.subr.mxu0 0.0
  %87 = vmatpush1.msra.mxu0 %v60
  %88 = vmatprep.subr.mxu0 0.0
  %89 = vmatpush1.msra.mxu0 %v61
  %90 = vmatprep.subr.mxu0 0.0
  %91 = vmatpush1.msra.mxu0 %v62
  %92 = vmatprep.subr.mxu0 0.0
  %93 = vmatpush1.msra.mxu0 %v63
  %94 = vmatprep.subr.mxu0 0.0
  %95 = vmatpush1.msra.mxu0 %v64
  %96 = vmatprep.subr.mxu0 0.0
  %97 = vmatpush1.msra.mxu0 %v65
  %98 = vmatprep.subr.mxu0 0.0
  %99 = vmatpush1.msra.mxu0 0.0
  %100 = vmatprep.subr.mxu0 0.0
  %101 = vmatpush1.msra.mxu0 0.0
  %102 = vmatprep.subr.mxu0 0.0
  %103 = vmatpush1.msra.mxu0 0.0
  %104 = vmatprep.subr.mxu0 0.0
  %105 = vmatpush1.msra.mxu0 0.0
  %106 = vmatprep.subr.mxu0 0.0
  %107 = vmatpush1.msra.mxu0 0.0
  %108 = vmatprep.subr.mxu0 0.0
  %109 = vmatpush1.msra.mxu0 0.0
  %110 = vmatprep.subr.mxu0 0.0
  %111 = vmatpush1.msra.mxu0 0.0
  %112 = vmatprep.subr.mxu0 0.0
  %113 = vmatpush1.msra.mxu0 0.0
  %114 = vmatprep.subr.mxu0 0.0
  %115 = vmatpush1.msra.mxu0 0.0
  %116 = vmatprep.subr.mxu0 0.0
  %117 = vmatpush1.msra.mxu0 0.0
  %118 = vmatprep.subr.mxu0 0.0
  %119 = vmatpush1.msra.mxu0 0.0
  %120 = vmatprep.subr.mxu0 0.0
  %121 = vmatpush1.msra.mxu0 0.0
  %122 = vmatprep.subr.mxu0 0.0
  %123 = vmatpush1.msra.mxu0 0.0
  %124 = vmatprep.subr.mxu0 0.0
  %125 = vmatpush1.msra.mxu0 0.0
  %126 = vmatprep.subr.mxu0 0.0
  %127 = vmatpush1.msra.mxu0 0.0
  %128 = vmatprep.subr.mxu0 0.0
  %129 = vmatpush1.msra.mxu0 0.0
  %130 = vmatprep.mubr.f32.mxu0 0.0
  %131 = vmatmul.mubr.f32.gmra.mrb[0].mxu0 %v46
  %v132 = vpop.f32.mrb[0].mxu0
  %v133 = vadd.f32 0.0, %v132
  %v134 = vpop.f32.mrb[0].mxu0
  %135 = vmatprep.mubr.f32.mxu0 0.0
  %136 = vmatmul.mubr.f32.gmra.mrb[0].mxu0 %v47
  %v137 = vpop.f32.mrb[0].mxu0
  %v138 = vadd.f32 0.0, %v137
  %v139 = vpop.f32.mrb[0].mxu0
  %140 = vmatprep.mubr.f32.mxu0 0.0
  %141 = vmatmul.mubr.f32.gmra.mrb[0].mxu0 %v48
  %v142 = vpop.f32.mrb[0].mxu0
  %v143 = vadd.f32 0.0, %v142
  %v144 = vpop.f32.mrb[0].mxu0
  %145 = vmatprep.mubr.f32.mxu0 0.0
  %146 = vmatmul.mubr.f32.gmra.mrb[0].mxu0 %v49
  %v147 = vpop.f32.mrb[0].mxu0
  %v148 = vadd.f32 0.0, %v147
  %v149 = vpop.f32.mrb[0].mxu0
  %150 = vdwg.mxu0
  %v151 = vadd.f32 %v34, %v133
  %v152 = vadd.f32 %v35, %v138
  %v153 = vadd.f32 %v36, %v143
  %v154 = vadd.f32 %v37, %v148
  %155 = vst [vmem:[#allocation2] sm:$0xff] %v151
  %156 = vst [vmem:[#allocation2 + $0x8] sm:$0xff] %v152
  %157 = vst [vmem:[#allocation2 + $0x10] sm:$0xff] %v153
  %158 = vst [vmem:[#allocation2 + $0x18] sm:$0xff] %v154
  // Predicated region
  $region34: #{uhg_sage_conv.1} parent=0 // pred_check
    %p159 = pneg %p26
  $region35: #{uhg_sage_conv.1} parent=0 // pred_check_branch
    %161 = sbr.rel (%p159) target = $region37
  $region36: #{uhg_sage_conv.1} parent=0 // pred_region
    %v162 = vld [vmem:[#allocation2] sm:$0xff]
    %v163 = vld [vmem:[#allocation2 + $0x8] sm:$0xff]
    %v164 = vld [vmem:[#allocation2 + $0x10] sm:$0xff]
    %v165 = vld [vmem:[#allocation2 + $0x18] sm:$0xff]
    %v166 = vld [vmem:[%s3] sm:$0xff]
    %v167 = vld [vmem:[%s3 + $0x8] sm:$0xff]
    %v168 = vld [vmem:[%s3 + $0x10] sm:$0xff]
    %v169 = vld [vmem:[%s3 + $0x18] sm:$0xff]
    %171 = vset.pattern.permute.xlu0 0
    %172 = vperm.xlu0 %171, %v166
    %v173 = vpop.permute.xlu0 %172
    %176 = vset.pattern.permute.xlu0 0
    %177 = vperm.xlu0 %176, %v167
    %v178 = vpop.permute.xlu0 %177
    %181 = vset.pattern.permute.xlu0 0
    %182 = vperm.xlu0 %181, %v168
    %v183 = vpop.permute.xlu0 %182
    %186 = vset.pattern.permute.xlu0 0
    %187 = vperm.xlu0 %186, %v169
    %v188 = vpop.permute.xlu0 %187
    %v190 = vmul.f32 %v162, %v173
    %v191 = vmul.f32 %v163, %v178
    %v192 = vmul.f32 %v164, %v183
    %v193 = vmul.f32 %v165, %v188
    %v194 = vld [vmem:[%s2] sm:$0xff]
    %v195 = vld [vmem:[%s2 + $0x8] sm:$0xff]
    %v196 = vld [vmem:[%s2 + $0x10] sm:$0xff]
    %v197 = vld [vmem:[%s2 + $0x18] sm:$0xff]
    %v198 = vld [vmem:[%s4] sm:$0xff]
    %v199 = vld [vmem:[%s4 + $0x8] sm:$0xff]
    %v200 = vld [vmem:[%s4 + $0x10] sm:$0xff]
    %v201 = vld [vmem:[%s4 + $0x18] sm:$0xff]
    %v202 = vld [vmem:[%s4 + $0x20] sm:$0xff]
    %v203 = vld [vmem:[%s4 + $0x28] sm:$0xff]
    %v204 = vld [vmem:[%s4 + $0x30] sm:$0xff]
    %v205 = vld [vmem:[%s4 + $0x38] sm:$0xff]
    %v206 = vld [vmem:[%s4 + $0x40] sm:$0xff]
    %v207 = vld [vmem:[%s4 + $0x48] sm:$0xff]
    %v208 = vld [vmem:[%s4 + $0x50] sm:$0xff]
    %v209 = vld [vmem:[%s4 + $0x58] sm:$0xff]
    %v210 = vld [vmem:[%s4 + $0x60] sm:$0xff]
    %v211 = vld [vmem:[%s4 + $0x68] sm:$0xff]
    %v212 = vld [vmem:[%s4 + $0x70] sm:$0xff]
    %v213 = vld [vmem:[%s4 + $0x78] sm:$0xff]
    %v214 = vld [vmem:[%s5] sm:$0xff]
    %v215 = vld [vmem:[%s5 + $0x8] sm:$0xff]
    %v216 = vld [vmem:[%s5 + $0x10] sm:$0xff]
    %v217 = vld [vmem:[%s5 + $0x18] sm:$0xff]
    %v218 = vld [vmem:[%s5 + $0x20] sm:$0xff]
    %v219 = vld [vmem:[%s5 + $0x28] sm:$0xff]
    %v220 = vld [vmem:[%s5 + $0x30] sm:$0xff]
    %v221 = vld [vmem:[%s5 + $0x38] sm:$0xff]
    %v222 = vld [vmem:[%s5 + $0x40] sm:$0xff]
    %v223 = vld [vmem:[%s5 + $0x48] sm:$0xff]
    %v224 = vld [vmem:[%s5 + $0x50] sm:$0xff]
    %v225 = vld [vmem:[%s5 + $0x58] sm:$0xff]
    %v226 = vld [vmem:[%s5 + $0x60] sm:$0xff]
    %v227 = vld [vmem:[%s5 + $0x68] sm:$0xff]
    %v228 = vld [vmem:[%s5 + $0x70] sm:$0xff]
    %v229 = vld [vmem:[%s5 + $0x78] sm:$0xff]
    %230 = vmatprep.subr.mxu0 0.0
    %231 = vmatpush1.msra.mxu0 %v214
    %232 = vmatprep.subr.mxu0 0.0
    %233 = vmatpush1.msra.mxu0 %v215
    %234 = vmatprep.subr.mxu0 0.0
    %235 = vmatpush1.msra.mxu0 %v216
    %236 = vmatprep.subr.mxu0 0.0
    %237 = vmatpush1.msra.mxu0 %v217
    %238 = vmatprep.subr.mxu0 0.0
    %239 = vmatpush1.msra.mxu0 %v218
    %240 = vmatprep.subr.mxu0 0.0
    %241 = vmatpush1.msra.mxu0 %v219
    %242 = vmatprep.subr.mxu0 0.0
    %243 = vmatpush1.msra.mxu0 %v220
    %244 = vmatprep.subr.mxu0 0.0
    %245 = vmatpush1.msra.mxu0 %v221
    %246 = vmatprep.subr.mxu0 0.0
    %247 = vmatpush1.msra.mxu0 %v222
    %248 = vmatprep.subr.mxu0 0.0
    %249 = vmatpush1.msra.mxu0 %v223
    %250 = vmatprep.subr.mxu0 0.0
    %251 = vmatpush1.msra.mxu0 %v224
    %252 = vmatprep.subr.mxu0 0.0
    %253 = vmatpush1.msra.mxu0 %v225
    %254 = vmatprep.subr.mxu0 0.0
    %255 = vmatpush1.msra.mxu0 %v226
    %256 = vmatprep.subr.mxu0 0.0
    %257 = vmatpush1.msra.mxu0 %v227
    %258 = vmatprep.subr.mxu0 0.0
    %259 = vmatpush1.msra.mxu0 %v228
    %260 = vmatprep.subr.mxu0 0.0
    %261 = vmatpush1.msra.mxu0 %v229
    %262 = vmatprep.subr.mxu0 0.0
    %263 = vmatpush1.msra.mxu0 0.0
    %264 = vmatprep.subr.mxu0 0.0
    %265 = vmatpush1.msra.mxu0 0.0
    %266 = vmatprep.subr.mxu0 0.0
    %267 = vmatpush1.msra.mxu0 0.0
    %268 = vmatprep.subr.mxu0 0.0
    %269 = vmatpush1.msra.mxu0 0.0
    %270 = vmatprep.subr.mxu0 0.0
    %271 = vmatpush1.msra.mxu0 0.0
    %272 = vmatprep.subr.mxu0 0.0
    %273 = vmatpush1.msra.mxu0 0.0
    %274 = vmatprep.subr.mxu0 0.0
    %275 = vmatpush1.msra.mxu0 0.0
    %276 = vmatprep.subr.mxu0 0.0
    %277 = vmatpush1.msra.mxu0 0.0
    %278 = vmatprep.subr.mxu0 0.0
    %279 = vmatpush1.msra.mxu0 0.0
    %280 = vmatprep.subr.mxu0 0.0
    %281 = vmatpush1.msra.mxu0 0.0
    %282 = vmatprep.subr.mxu0 0.0
    %283 = vmatpush1.msra.mxu0 0.0
    %284 = vmatprep.subr.mxu0 0.0
    %285 = vmatpush1.msra.mxu0 0.0
    %286 = vmatprep.subr.mxu0 0.0
    %287 = vmatpush1.msra.mxu0 0.0
    %288 = vmatprep.subr.mxu0 0.0
    %289 = vmatpush1.msra.mxu0 0.0
    %290 = vmatprep.subr.mxu0 0.0
    %291 = vmatpush1.msra.mxu0 0.0
    %292 = vmatprep.subr.mxu0 0.0
    %293 = vmatpush1.msra.mxu0 0.0
    %294 = vmatprep.mubr.f32.mxu0 0.0
    %295 = vmatmul.mubr.f32.gmra.mrb[0].mxu0 %v190
    %v296 = vpop.f32.mrb[0].mxu0
    %v297 = vadd.f32 0.0, %v296
    %v298 = vpop.f32.mrb[0].mxu0
    %299 = vmatprep.mubr.f32.mxu0 0.0
    %300 = vmatmul.mubr.f32.gmra.mrb[0].mxu0 %v191
    %v301 = vpop.f32.mrb[0].mxu0
    %v302 = vadd.f32 0.0, %v301
    %v303 = vpop.f32.mrb[0].mxu0
    %304 = vmatprep.mubr.f32.mxu0 0.0
    %305 = vmatmul.mubr.f32.gmra.mrb[0].mxu0 %v192
    %v306 = vpop.f32.mrb[0].mxu0
    %v307 = vadd.f32 0.0, %v306
    %v308 = vpop.f32.mrb[0].mxu0
    %309 = vmatprep.mubr.f32.mxu0 0.0
    %310 = vmatmul.mubr.f32.gmra.mrb[0].mxu0 %v193
    %v311 = vpop.f32.mrb[0].mxu0
    %v312 = vadd.f32 0.0, %v311
    %v313 = vpop.f32.mrb[0].mxu0
    %314 = vdwg.mxu0
    %315 = vmatprep.subr.mxu0 0.0
    %316 = vmatpush1.msra.mxu0 %v198
    %317 = vmatprep.subr.mxu0 0.0
    %318 = vmatpush1.msra.mxu0 %v199
    %319 = vmatprep.subr.mxu0 0.0
    %320 = vmatpush1.msra.mxu0 %v200
    %321 = vmatprep.subr.mxu0 0.0
    %322 = vmatpush1.msra.mxu0 %v201
    %323 = vmatprep.subr.mxu0 0.0
    %324 = vmatpush1.msra.mxu0 %v202
    %325 = vmatprep.subr.mxu0 0.0
    %326 = vmatpush1.msra.mxu0 %v203
    %327 = vmatprep.subr.mxu0 0.0
    %328 = vmatpush1.msra.mxu0 %v204
    %329 = vmatprep.subr.mxu0 0.0
    %330 = vmatpush1.msra.mxu0 %v205
    %331 = vmatprep.subr.mxu0 0.0
    %332 = vmatpush1.msra.mxu0 %v206
    %333 = vmatprep.subr.mxu0 0.0
    %334 = vmatpush1.msra.mxu0 %v207
    %335 = vmatprep.subr.mxu0 0.0
    %336 = vmatpush1.msra.mxu0 %v208
    %337 = vmatprep.subr.mxu0 0.0
    %338 = vmatpush1.msra.mxu0 %v209
    %339 = vmatprep.subr.mxu0 0.0
    %340 = vmatpush1.msra.mxu0 %v210
    %341 = vmatprep.subr.mxu0 0.0
    %342 = vmatpush1.msra.mxu0 %v211
    %343 = vmatprep.subr.mxu0 0.0
    %344 = vmatpush1.msra.mxu0 %v212
    %345 = vmatprep.subr.mxu0 0.0
    %346 = vmatpush1.msra.mxu0 %v213
    %347 = vmatprep.subr.mxu0 0.0
    %348 = vmatpush1.msra.mxu0 0.0
    %349 = vmatprep.subr.mxu0 0.0
    %350 = vmatpush1.msra.mxu0 0.0
    %351 = vmatprep.subr.mxu0 0.0
    %352 = vmatpush1.msra.mxu0 0.0
    %353 = vmatprep.subr.mxu0 0.0
    %354 = vmatpush1.msra.mxu0 0.0
    %355 = vmatprep.subr.mxu0 0.0
    %356 = vmatpush1.msra.mxu0 0.0
    %357 = vmatprep.subr.mxu0 0.0
    %358 = vmatpush1.msra.mxu0 0.0
    %359 = vmatprep.subr.mxu0 0.0
    %360 = vmatpush1.msra.mxu0 0.0
    %361 = vmatprep.subr.mxu0 0.0
    %362 = vmatpush1.msra.mxu0 0.0
    %363 = vmatprep.subr.mxu0 0.0
    %364 = vmatpush1.msra.mxu0 0.0
    %365 = vmatprep.subr.mxu0 0.0
    %366 = vmatpush1.msra.mxu0 0.0
    %367 = vmatprep.subr.mxu0 0.0
    %368 = vmatpush1.msra.mxu0 0.0
    %369 = vmatprep.subr.mxu0 0.0
    %370 = vmatpush1.msra.mxu0 0.0
    %371 = vmatprep.subr.mxu0 0.0
    %372 = vmatpush1.msra.mxu0 0.0
    %373 = vmatprep.subr.mxu0 0.0
    %374 = vmatpush1.msra.mxu0 0.0
    %375 = vmatprep.subr.mxu0 0.0
    %376 = vmatpush1.msra.mxu0 0.0
    %377 = vmatprep.subr.mxu0 0.0
    %378 = vmatpush1.msra.mxu0 0.0
    %379 = vmatprep.mubr.f32.mxu0 0.0
    %380 = vmatmul.mubr.f32.gmra.mrb[0].mxu0 %v194
    %v381 = vpop.f32.mrb[0].mxu0
    %v382 = vadd.f32 %v297, %v381
    %v383 = vpop.f32.mrb[0].mxu0
    %384 = vmatprep.mubr.f32.mxu0 0.0
    %385 = vmatmul.mubr.f32.gmra.mrb[0].mxu0 %v195
    %v386 = vpop.f32.mrb[0].mxu0
    %v387 = vadd.f32 %v302, %v386
    %v388 = vpop.f32.mrb[0].mxu0
    %389 = vmatprep.mubr.f32.mxu0 0.0
    %390 = vmatmul.mubr.f32.gmra.mrb[0].mxu0 %v196
    %v391 = vpop.f32.mrb[0].mxu0
    %v392 = vadd.f32 %v307, %v391
    %v393 = vpop.f32.mrb[0].mxu0
    %394 = vmatprep.mubr.f32.mxu0 0.0
    %395 = vmatmul.mubr.f32.gmra.mrb[0].mxu0 %v197
    %v396 = vpop.f32.mrb[0].mxu0
    %v397 = vadd.f32 %v312, %v396
    %v398 = vpop.f32.mrb[0].mxu0
    %399 = vdwg.mxu0
    %v400 = vld [vmem:[%s6] sm:$0x1]
    %v402 = vlaneseq
    %v403 = vshrl.u32 %v402, 7
    %v404 = vsub.s32 0, %v403
    %v405 = vrot.slane %v400, %v404
    %v407 = vadd.f32 %v382, %v405
    %v408 = vadd.f32 %v387, %v405
    %v409 = vadd.f32 %v392, %v405
    %v410 = vadd.f32 %v397, %v405
    %v411 = vmax.f32 %v407, 0.0
    %v412 = vmax.f32 %v408, 0.0
    %v413 = vmax.f32 %v409, 0.0
    %v414 = vmax.f32 %v410, 0.0
    %v415 = vmul.f32 %v411, %v411
    %v416 = vmul.f32 %v412, %v412
    %v417 = vmul.f32 %v413, %v413
    %v418 = vmul.f32 %v414, %v414
    %419 = vadd.xlane.f32.xlu0 %v415
    %v420 = vpop.xlane.xlu0 %419
    %421 = vadd.xlane.f32.xlu0 %v416
    %v422 = vpop.xlane.xlu0 %421
    %423 = vadd.xlane.f32.xlu0 %v417
    %v424 = vpop.xlane.xlu0 %423
    %425 = vadd.xlane.f32.xlu0 %v418
    %v426 = vpop.xlane.xlu0 %425
    %v427 = vsub.f32 %v420, 1.0
    %v428 = vsub.f32 %v422, 1.0
    %v429 = vsub.f32 %v424, 1.0
    %v430 = vsub.f32 %v426, 1.0
    %v431 = vmax.f32 %v427, 1e-08
    %v432 = vmax.f32 %v428, 1e-08
    %v433 = vmax.f32 %v429, 1e-08
    %v434 = vmax.f32 %v430, 1e-08
    %v435 = vrsqrt.pop %v431
    %v436 = vrsqrt.pop %v432
    %v437 = vrsqrt.pop %v433
    %v438 = vrsqrt.pop %v434
    %v439 = vmul.f32 %v411, %v435
    %v440 = vmul.f32 %v412, %v436
    %v441 = vmul.f32 %v413, %v437
    %v442 = vmul.f32 %v414, %v438
    %v443 = vlaneseq
    %v444 = vand.u32 %v443, 127
    %vm445 = vcmp.lt.s32.totalorder %v444, 32
    %v446 = vsel %vm445, 1, 0
    %v447 = vcvt.s32.f32 %v446
    %vm448 = vcmp.eq.f32.partialorder %v420, 0.0
    %vm449 = vcmp.eq.f32.partialorder %v422, 0.0
    %vm450 = vcmp.eq.f32.partialorder %v424, 0.0
    %vm451 = vcmp.eq.f32.partialorder %v426, 0.0
    %v452 = vsel %vm448, 1, 0
    %v453 = vsel %vm449, 1, 0
    %v454 = vsel %vm450, 1, 0
    %v455 = vsel %vm451, 1, 0
    %vm456 = vcmp.eq.s32.totalorder %v452, 1
    %vm457 = vcmp.eq.s32.totalorder %v453, 1
    %vm458 = vcmp.eq.s32.totalorder %v454, 1
    %vm459 = vcmp.eq.s32.totalorder %v455, 1
    %v460 = vsel %vm456, %v447, %v439
    %v461 = vsel %vm457, %v447, %v440
    %v462 = vsel %vm458, %v447, %v441
    %v463 = vsel %vm459, %v447, %v442
    %v464 = vmul.f32 %v420, %v435
    %v465 = vmul.f32 %v422, %v436
    %v466 = vmul.f32 %v424, %v437
    %v467 = vmul.f32 %v426, %v438
    %v468 = vmul.f32 %v464, %v435
    %v469 = vmul.f32 %v465, %v436
    %v470 = vmul.f32 %v466, %v437
    %v471 = vmul.f32 %v467, %v438
    %v472 = vsel %vm448, 32.0, %v468
    %v473 = vsel %vm449, 32.0, %v469
    %v474 = vsel %vm450, 32.0, %v470
    %v475 = vsel %vm451, 32.0, %v471
    %v476 = vrsqrt.pop %v472
    %v477 = vmul.f32 %v472, %v476
    %vm478 = vcmp.eq.f32.partialorder %v472, inf
    %v479 = vsel %vm478, %v472, %v477
    %vm480 = vcmp.eq.f32.partialorder %v472, 0.0
    %v481 = vand.u32 %v472, 2147483648
    %v482 = vsel %vm480, %v481, %v479
    %v483 = vrsqrt.pop %v473
    %v484 = vmul.f32 %v473, %v483
    %vm485 = vcmp.eq.f32.partialorder %v473, inf
    %v486 = vsel %vm485, %v473, %v484
    %vm487 = vcmp.eq.f32.partialorder %v473, 0.0
    %v488 = vand.u32 %v473, 2147483648
    %v489 = vsel %vm487, %v488, %v486
    %v490 = vrsqrt.pop %v474
    %v491 = vmul.f32 %v474, %v490
    %vm492 = vcmp.eq.f32.partialorder %v474, inf
    %v493 = vsel %vm492, %v474, %v491
    %vm494 = vcmp.eq.f32.partialorder %v474, 0.0
    %v495 = vand.u32 %v474, 2147483648
    %v496 = vsel %vm494, %v495, %v493
    %v497 = vrsqrt.pop %v475
    %v498 = vmul.f32 %v475, %v497
    %vm499 = vcmp.eq.f32.partialorder %v475, inf
    %v500 = vsel %vm499, %v475, %v498
    %vm501 = vcmp.eq.f32.partialorder %v475, 0.0
    %v502 = vand.u32 %v475, 2147483648
    %v503 = vsel %vm501, %v502, %v500
    %v504 = vmax.f32 %v482, 1e-08
    %v505 = vmax.f32 %v489, 1e-08
    %v506 = vmax.f32 %v496, 1e-08
    %v507 = vmax.f32 %v503, 1e-08
    %v508 = vrcp.pop %v504
    %v509 = vmul.f32 1.0, %v508
    %v510 = vrcp.pop %v505
    %v511 = vmul.f32 1.0, %v510
    %v512 = vrcp.pop %v506
    %v513 = vmul.f32 1.0, %v512
    %v514 = vrcp.pop %v507
    %v515 = vmul.f32 1.0, %v514
    %v516 = vmul.f32 %v460, %v509
    %v517 = vmul.f32 %v461, %v511
    %v518 = vmul.f32 %v462, %v513
    %v519 = vmul.f32 %v463, %v515
    %vm520 = vcmp.eq.s32.totalorder %v444, 32
    %v521 = vsel %vm520, 1.0, %v516
    %v522 = vsel %vm520, 1.0, %v517
    %v523 = vsel %vm520, 1.0, %v518
    %v524 = vsel %vm520, 1.0, %v519
    %525 = vst [vmem:[%s7] sm:$0xff] %v521
    %526 = vst [vmem:[%s7 + $0x8] sm:$0xff] %v522
    %527 = vst [vmem:[%s7 + $0x10] sm:$0xff] %v523
    %528 = vst [vmem:[%s7 + $0x18] sm:$0xff] %v524
  $region37: #{uhg_sage_conv.1} parent=0 // pred_fallthru
    _
  // Predicated region
  $region38: #{uhg_sage_conv.1} parent=0 // pred_check
    _
  $region39: #{uhg_sage_conv.1} parent=0 // pred_check_branch
    %530 = sbr.rel (0) target = $region41
  $region40: #{uhg_sage_conv.1} parent=0 // pred_region
    _
  $region41: #{uhg_sage_conv.1} parent=0 // pred_fallthru
    _
  // Predicated region
  $region42: #{uhg_sage_conv.1} parent=0 // pred_check
    _
  $region43: #{uhg_sage_conv.1} parent=0 // pred_check_branch
    %532 = sbr.rel (0) target = $region45
  $region44: #{uhg_sage_conv.1} parent=0 // pred_region
    _
  $region45: #{uhg_sage_conv.1} parent=0 // pred_fallthru
    _

</llo_original>
